<compile_context>
chip_gen: v7x
topology: tpu7x:2x2x1
jax: 0.10.0
libtpu: 0.0.40
codegen_flags: <defaults>
</compile_context>

<pallas_src>
import functools

import jax
import jax.numpy as jnp
import numpy as np
from jax import lax
from jax.experimental import pallas as pl
from jax.experimental.pallas import tpu as pltpu

_LANE = 128                     # TPU lane width
_MAX_TILE_R = 16384             # lanes per grid step (review: 8192-32768)
_VMEM_LIMIT = 32 * 1024 * 1024  # explicit scoped-VMEM limit (v5e default is 16 MiB)


def _round_up(x: int, m: int) -> int:
    return ((x + m - 1) // m) * m


def _laneline_loss_kernel(pred_ref, gt_ref, out_ref, acc_ref, *,
                          num_y_steps: int, rows: int, tile_r: int,
                          n_inner: int, first_pad_tile: int, mask_any: bool):
    """One grid step (o, i) reduces one (anchor_dim, tile_r) slab pair.

    pred_ref / gt_ref : (anchor_dim, tile_r) VMEM tiles (native dtype)
    out_ref           : (8, 128) f32 VMEM block, resident per outer index o
    acc_ref           : (1, tile_r) f32 VMEM scratch (per-lane partial sums)
    """
    K = num_y_steps
    o = pl.program_id(0)
    i = pl.program_id(1)

    @pl.when(i == 0)
    def _init():
        acc_ref[...] = jnp.zeros_like(acc_ref)

    eps = jnp.float32(1e-9)
    one = jnp.float32(1.0)
    inv_k = jnp.float32(1.0 / K)

    # Single load per slab, cast to f32 after the load; static 8-aligned
    # sublane slices (K=8) carve out x / z / vis / cls.
    p = pred_ref[...].astype(jnp.float32)          # (3K+1, TR)
    g = gt_ref[...].astype(jnp.float32)            # (3K+1, TR)
    p_x, p_z = p[0:K], p[K:2 * K]
    p_vis, p_cls = p[2 * K:3 * K], p[3 * K:3 * K + 1]
    g_x, g_z = g[0:K], g[K:2 * K]
    g_vis, g_cls = g[2 * K:3 * K], g[3 * K:3 * K + 1]

    # loss0: per-point visibility BCE (asymmetric +eps, exactly as in torch).
    bce_vis = (g_vis * jnp.log(p_vis + eps)
               + (one - g_vis + eps) * jnp.log(one - p_vis + eps))   # (K, TR)

    # loss2: L1 distance gated by (gt_cls * gt_vis); gate hoisted & reused.
    w = g_cls * g_vis                                                # (K, TR)
    per_elem = (jnp.abs(w * (p_x - g_x)) + jnp.abs(w * (p_z - g_z))
                - inv_k * bce_vis)                                   # (K, TR)

    # loss1: class BCE (no +eps on the (1 - gt) weight, as in torch).
    bce_cls = (g_cls * jnp.log(p_cls + eps)
               + (one - g_cls) * jnp.log(one - p_cls + eps))         # (1, TR)

    # Fused per-column sum: one sublane reduce per tile.
    col_sum = jnp.sum(per_elem, axis=0, keepdims=True) - bce_cls     # (1, TR)

    if mask_any:
        t = o * n_inner + i                       # global tile index
        is_pad_tile = t >= first_pad_tile

        @pl.when(is_pad_tile)
        def _acc_masked():
            lane = lax.broadcasted_iota(jnp.int32, (1, tile_r), 1)
            valid = ((t * tile_r + lane) < rows).astype(jnp.float32)
            acc_ref[...] += valid * col_sum

        @pl.when(jnp.logical_not(is_pad_tile))
        def _acc_unmasked():
            acc_ref[...] += col_sum
    else:
        acc_ref[...] += col_sum

    @pl.when(i == pl.num_programs(1) - 1)
    def _final():
        # Single cross-lane reduce per outer block; broadcast the scalar over
        # the (8,128) output block (wrapper reads element [0, 0]).
        total = jnp.sum(acc_ref[...])
        out_ref[...] = jnp.full(out_ref.shape, total, jnp.float32)


def laneline_loss_gflat(pred_3D_lanes, gt_3D_lanes, pred_hcam, gt_hcam,
                        pred_pitch, gt_pitch, *, num_types: int,
                        num_y_steps: int, pred_cam: bool):
    """JAX wrapper mirroring Laneline_loss_gflat.forward."""
    N, W, C = pred_3D_lanes.shape
    K = num_y_steps
    anchor_dim = 3 * K + 1
    assert C == num_types * anchor_dim, "channel dim must be num_types*(3K+1)"
    R = N * W * num_types

    # Lane-dense tiling over R.
    tile_r = min(_MAX_TILE_R, _round_up(R, _LANE))
    num_tiles = pl.cdiv(R, tile_r)
    n_outer = 2 if num_tiles >= 2 else 1           # v7x: 2 TCs; harmless on 1 TC
    num_tiles = _round_up(num_tiles, n_outer)
    n_inner = num_tiles // n_outer
    r_pad = num_tiles * tile_r
    mask_any = (r_pad != R)
    first_pad_tile = R // tile_r                    # first tile holding padding

    def _to_slab(x):
        # (N, W, C) -> (anchor_dim, R): one fused transpose per tensor
        # (native dtype kept; padded columns are zeros and masked in-kernel).
        t = x.reshape(R, anchor_dim).T
        if r_pad != R:
            t = jnp.pad(t, ((0, 0), (0, r_pad - R)))
        return t

    pred_slab = _to_slab(pred_3D_lanes)
    gt_slab = _to_slab(gt_3D_lanes)

    kernel = functools.partial(
        _laneline_loss_kernel, num_y_steps=K, rows=R, tile_r=tile_r,
        n_inner=n_inner, first_pad_tile=first_pad_tile, mask_any=mask_any)

    slab_spec = pl.BlockSpec((anchor_dim, tile_r),
                             lambda o, i: (0, o * n_inner + i))

    itemsize = np.dtype(pred_3D_lanes.dtype).itemsize
    cost = pl.CostEstimate(
        flops=18 * R * K + 12 * R,
        transcendentals=2 * R * K + 2 * R,          # the BCE logs (EUP floor)
        bytes_accessed=2 * r_pad * anchor_dim * itemsize,
    )

    partials = pl.pallas_call(
        kernel,
        out_shape=jax.ShapeDtypeStruct((n_outer * 8, _LANE), jnp.float32),
        grid=(n_outer, n_inner),
        in_specs=[slab_spec, slab_spec],
        out_specs=pl.BlockSpec((8, _LANE), lambda o, i: (o, 0)),
        scratch_shapes=[pltpu.VMEM((1, tile_r), jnp.float32)],
        compiler_params=pltpu.CompilerParams(
            dimension_semantics=("parallel", "arbitrary"),
            vmem_limit_bytes=_VMEM_LIMIT),
        cost_estimate=cost,
    )(pred_slab, gt_slab)

    total = jnp.sum(partials.reshape(n_outer, 8, _LANE)[:, 0, 0])

    if pred_cam:
        # loss3: 4N scalars — cheaper as plain jnp than a kernel epilogue.
        total = total \
            + jnp.sum(jnp.abs(gt_pitch.astype(jnp.float32)
                              - pred_pitch.astype(jnp.float32))) \
            + jnp.sum(jnp.abs(gt_hcam.astype(jnp.float32)
                              - pred_hcam.astype(jnp.float32)))
    return total


def _reference_loss(pred_3D_lanes, gt_3D_lanes, pred_hcam, gt_hcam,
                    pred_pitch, gt_pitch, *, num_types, num_y_steps, pred_cam):
    """Pure-jnp transcription of the PyTorch forward, for verification."""
    K = num_y_steps
    anchor_dim = 3 * K + 1
    N, W, _ = pred_3D_lanes.shape
    pred = pred_3D_lanes.reshape(N, W, num_types, anchor_dim)
    gt = gt_3D_lanes.reshape(N, W, num_types, anchor_dim)
    pred_cls = pred[..., -1:]
    pred_anchors = pred[..., : 2 * K]
    pred_vis = pred[..., 2 * K: 3 * K]
    gt_cls = gt[..., -1:]
    gt_anchors = gt[..., : 2 * K]
    gt_vis = gt[..., 2 * K: 3 * K]
    eps = 1e-9
    loss0 = -jnp.sum(gt_vis * jnp.log(pred_vis + eps)
                     + (1.0 - gt_vis + eps) * jnp.log(1.0 - pred_vis + eps)) / K
    loss1 = -jnp.sum(gt_cls * jnp.log(pred_cls + eps)
                     + (1.0 - gt_cls) * jnp.log(1.0 - pred_cls + eps))
    vis_cat = jnp.concatenate([gt_vis, gt_vis], axis=3)
    loss2 = jnp.sum(jnp.sum(jnp.abs(gt_cls * vis_cat * (pred_anchors - gt_anchors)), axis=3))
    total = loss0 + loss1 + loss2
    if pred_cam:
        total = total + jnp.sum(jnp.abs(gt_pitch - pred_pitch)) \
                      + jnp.sum(jnp.abs(gt_hcam - pred_hcam))
    return total


if __name__ == "__main__":
    # Small, module-consistent shapes: N=2 images, W=8 anchors (ipm_w/8),
    # num_types=3 lane types, K=num_y_steps=8  ->  channel dim = 3*(3*8+1) = 75.
    num_types = 3
    num_y_steps = 8
    N, W = 2, 8
    C = num_types * (3 * num_y_steps + 1)

    key = jax.random.PRNGKey(0)
    k1, k2, k3, k4, k5, k6 = jax.random.split(key, 6)
    # Probabilities / visibilities sampled in (0,1) so logs stay finite
    # (matches the assumption of the original loss that these are sigmoids).
    pred_lanes = jax.random.uniform(k1, (N, W, C), jnp.float32, 0.05, 0.95)
    gt_lanes = jax.random.uniform(k2, (N, W, C), jnp.float32, 0.0, 1.0)
    pred_hcam = jax.random.uniform(k3, (N,), jnp.float32, 1.0, 2.0)
    gt_hcam = jax.random.uniform(k4, (N,), jnp.float32, 1.0, 2.0)
    pred_pitch = jax.random.uniform(k5, (N,), jnp.float32, -0.1, 0.1)
    gt_pitch = jax.random.uniform(k6, (N,), jnp.float32, -0.1, 0.1)

    for pred_cam in (True, False):
        loss = laneline_loss_gflat(
            pred_lanes, gt_lanes, pred_hcam, gt_hcam, pred_pitch, gt_pitch,
            num_types=num_types, num_y_steps=num_y_steps, pred_cam=pred_cam)
        loss = jax.block_until_ready(loss)

        ref = _reference_loss(
            pred_lanes, gt_lanes, pred_hcam, gt_hcam, pred_pitch, gt_pitch,
            num_types=num_types, num_y_steps=num_y_steps, pred_cam=pred_cam)
        ref = jax.block_until_ready(ref)

        np.testing.assert_allclose(np.asarray(loss), np.asarray(ref),
                                   rtol=1e-4, atol=1e-3)

    print("KERNEL_OK")
</pallas_src>

<mosaic_0001>
module attributes {stable_mosaic.version = 11 : i64} {
  func.func @_laneline_loss_kernel(%arg0: i32, %arg1: i32, %arg2: memref<25x128xf32, #tpu.memory_space<vmem>>, %arg3: memref<25x128xf32, #tpu.memory_space<vmem>>, %arg4: memref<8x128xf32, #tpu.memory_space<vmem>>, %arg5: memref<1x128xf32, #tpu.memory_space<vmem>>) attributes {dimension_semantics = [#tpu.dimension_semantics<parallel>, #tpu.dimension_semantics<arbitrary>], iteration_bounds = array<i64: 1, 1>, scalar_prefetch = 0 : i64, scratch_operands = 1 : i64, tpu.core_type = #tpu.core_type<tc>, window_params = [{transform_indices = @transform_0, window_bounds = array<i64: 25, 128>}, {transform_indices = @transform_1, window_bounds = array<i64: 25, 128>}, {transform_indices = @transform_2, window_bounds = array<i64: 8, 128>}]} {
    %c0_i32 = arith.constant 0 : i32
    %0 = arith.cmpi eq, %arg1, %c0_i32 : i32
    %1 = arith.extui %0 : i1 to i32
    %c0_i32_0 = arith.constant 0 : i32
    %2 = arith.cmpi ne, %1, %c0_i32_0 : i32
    scf.if %2 {
      %cst_19 = arith.constant 0.000000e+00 : f32
      %67 = vector.broadcast %cst_19 : f32 to vector<1x128xf32>
      %c0_20 = arith.constant 0 : index
      %c0_21 = arith.constant 0 : index
      %68 = vector.load %arg5[%c0_20, %c0_21] : memref<1x128xf32, #tpu.memory_space<vmem>>, vector<1x128xf32>
      tpu.vector_store %arg5[%c0_20, %c0_21], %67 {strides = array<i32>} : memref<1x128xf32, #tpu.memory_space<vmem>>, vector<1x128xf32>,
    } else {
    }
    %c0 = arith.constant 0 : index
    %c0_1 = arith.constant 0 : index
    %3 = vector.load %arg2[%c0, %c0_1] : memref<25x128xf32, #tpu.memory_space<vmem>>, vector<25x128xf32>
    %c0_2 = arith.constant 0 : index
    %c0_3 = arith.constant 0 : index
    %4 = vector.load %arg3[%c0_2, %c0_3] : memref<25x128xf32, #tpu.memory_space<vmem>>, vector<25x128xf32>
    %5 = vector.extract_strided_slice %3 {offsets = [0, 0], sizes = [8, 128], strides = [1, 1]} : vector<25x128xf32> to vector<8x128xf32>
    %6 = vector.extract_strided_slice %3 {offsets = [8, 0], sizes = [8, 128], strides = [1, 1]} : vector<25x128xf32> to vector<8x128xf32>
    %7 = vector.extract_strided_slice %3 {offsets = [16, 0], sizes = [8, 128], strides = [1, 1]} : vector<25x128xf32> to vector<8x128xf32>
    %8 = vector.extract_strided_slice %3 {offsets = [24, 0], sizes = [1, 128], strides = [1, 1]} : vector<25x128xf32> to vector<1x128xf32>
    %9 = vector.extract_strided_slice %4 {offsets = [0, 0], sizes = [8, 128], strides = [1, 1]} : vector<25x128xf32> to vector<8x128xf32>
    %10 = vector.extract_strided_slice %4 {offsets = [8, 0], sizes = [8, 128], strides = [1, 1]} : vector<25x128xf32> to vector<8x128xf32>
    %11 = vector.extract_strided_slice %4 {offsets = [16, 0], sizes = [8, 128], strides = [1, 1]} : vector<25x128xf32> to vector<8x128xf32>
    %12 = vector.extract_strided_slice %4 {offsets = [24, 0], sizes = [1, 128], strides = [1, 1]} : vector<25x128xf32> to vector<1x128xf32>
    %cst = arith.constant 9.99999971E-10 : f32
    %13 = vector.broadcast %cst : f32 to vector<8x128xf32>
    %14 = arith.addf %7, %13 : vector<8x128xf32>
    %15 = math.log %14 : vector<8x128xf32>
    %16 = arith.mulf %11, %15 : vector<8x128xf32>
    %cst_4 = arith.constant 1.000000e+00 : f32
    %17 = vector.broadcast %cst_4 : f32 to vector<8x128xf32>
    %18 = arith.subf %17, %11 : vector<8x128xf32>
    %cst_5 = arith.constant 9.99999971E-10 : f32
    %19 = vector.broadcast %cst_5 : f32 to vector<8x128xf32>
    %20 = arith.addf %18, %19 : vector<8x128xf32>
    %cst_6 = arith.constant 1.000000e+00 : f32
    %21 = vector.broadcast %cst_6 : f32 to vector<8x128xf32>
    %22 = arith.subf %21, %7 : vector<8x128xf32>
    %cst_7 = arith.constant 9.99999971E-10 : f32
    %23 = vector.broadcast %cst_7 : f32 to vector<8x128xf32>
    %24 = arith.addf %22, %23 : vector<8x128xf32>
    %25 = math.log %24 : vector<8x128xf32>
    %26 = arith.mulf %20, %25 : vector<8x128xf32>
    %27 = arith.addf %16, %26 : vector<8x128xf32>
    %28 = vector.broadcast %12 : vector<1x128xf32> to vector<8x128xf32>
    %29 = arith.mulf %28, %11 : vector<8x128xf32>
    %30 = arith.subf %5, %9 : vector<8x128xf32>
    %31 = arith.mulf %29, %30 : vector<8x128xf32>
    %32 = math.absf %31 : vector<8x128xf32>
    %33 = arith.subf %6, %10 : vector<8x128xf32>
    %34 = arith.mulf %29, %33 : vector<8x128xf32>
    %35 = math.absf %34 : vector<8x128xf32>
    %36 = arith.addf %32, %35 : vector<8x128xf32>
    %cst_8 = arith.constant 1.250000e-01 : f32
    %37 = vector.broadcast %cst_8 : f32 to vector<8x128xf32>
    %38 = arith.mulf %37, %27 : vector<8x128xf32>
    %39 = arith.subf %36, %38 : vector<8x128xf32>
    %cst_9 = arith.constant 9.99999971E-10 : f32
    %40 = vector.broadcast %cst_9 : f32 to vector<1x128xf32>
    %41 = arith.addf %8, %40 : vector<1x128xf32>
    %42 = math.log %41 : vector<1x128xf32>
    %43 = arith.mulf %12, %42 : vector<1x128xf32>
    %cst_10 = arith.constant 1.000000e+00 : f32
    %44 = vector.broadcast %cst_10 : f32 to vector<1x128xf32>
    %45 = arith.subf %44, %12 : vector<1x128xf32>
    %cst_11 = arith.constant 1.000000e+00 : f32
    %46 = vector.broadcast %cst_11 : f32 to vector<1x128xf32>
    %47 = arith.subf %46, %8 : vector<1x128xf32>
    %cst_12 = arith.constant 9.99999971E-10 : f32
    %48 = vector.broadcast %cst_12 : f32 to vector<1x128xf32>
    %49 = arith.addf %47, %48 : vector<1x128xf32>
    %50 = math.log %49 : vector<1x128xf32>
    %51 = arith.mulf %45, %50 : vector<1x128xf32>
    %52 = arith.addf %43, %51 : vector<1x128xf32>
    %cst_13 = arith.constant dense<0.000000e+00> : vector<128xf32>
    %53 = vector.multi_reduction <add>, %39, %cst_13 [0] : vector<8x128xf32> to vector<128xf32>
    %54 = vector.shape_cast %53 : vector<128xf32> to vector<1x128xf32>
    %55 = arith.subf %54, %52 : vector<1x128xf32>
    %c1_i32 = arith.constant 1 : i32
    %56 = arith.muli %arg0, %c1_i32 : i32
    %57 = arith.addi %56, %arg1 : i32
    %c0_i32_14 = arith.constant 0 : i32
    %58 = arith.cmpi sge, %57, %c0_i32_14 : i32
    %59 = arith.extui %58 : i1 to i32
    %c0_i32_15 = arith.constant 0 : i32
    %60 = arith.cmpi ne, %59, %c0_i32_15 : i32
    scf.if %60 {
      %67 = tpu.iota {dimensions = array<i32: 1>} : vector<1x128xi32>
      %c128_i32 = arith.constant 128 : i32
      %68 = arith.muli %57, %c128_i32 : i32
      %69 = vector.broadcast %68 : i32 to vector<1x128xi32>
      %70 = arith.addi %69, %67 : vector<1x128xi32>
      %c48_i32 = arith.constant 48 : i32
      %71 = vector.broadcast %c48_i32 : i32 to vector<1x128xi32>
      %72 = arith.cmpi slt, %70, %71 : vector<1x128xi32>
      %73 = arith.extui %72 : vector<1x128xi1> to vector<1x128xi32>
      %74 = arith.sitofp %73 : vector<1x128xi32> to vector<1x128xf32>
      %c0_19 = arith.constant 0 : index
      %c0_20 = arith.constant 0 : index
      %75 = vector.load %arg5[%c0_19, %c0_20] : memref<1x128xf32, #tpu.memory_space<vmem>>, vector<1x128xf32>
      %76 = arith.mulf %74, %55 : vector<1x128xf32>
      %77 = arith.addf %75, %76 : vector<1x128xf32>
      %c0_21 = arith.constant 0 : index
      %c0_22 = arith.constant 0 : index
      %78 = vector.load %arg5[%c0_21, %c0_22] : memref<1x128xf32, #tpu.memory_space<vmem>>, vector<1x128xf32>
      tpu.vector_store %arg5[%c0_21, %c0_22], %77 {strides = array<i32>} : memref<1x128xf32, #tpu.memory_space<vmem>>, vector<1x128xf32>,
    } else {
    }
    %true = arith.constant true
    %61 = arith.xori %58, %true : i1
    %62 = arith.extui %61 : i1 to i32
    %c0_i32_16 = arith.constant 0 : i32
    %63 = arith.cmpi ne, %62, %c0_i32_16 : i32
    scf.if %63 {
      %c0_19 = arith.constant 0 : index
      %c0_20 = arith.constant 0 : index
      %67 = vector.load %arg5[%c0_19, %c0_20] : memref<1x128xf32, #tpu.memory_space<vmem>>, vector<1x128xf32>
      %68 = arith.addf %67, %55 : vector<1x128xf32>
      %c0_21 = arith.constant 0 : index
      %c0_22 = arith.constant 0 : index
      %69 = vector.load %arg5[%c0_21, %c0_22] : memref<1x128xf32, #tpu.memory_space<vmem>>, vector<1x128xf32>
      tpu.vector_store %arg5[%c0_21, %c0_22], %68 {strides = array<i32>} : memref<1x128xf32, #tpu.memory_space<vmem>>, vector<1x128xf32>,
    } else {
    }
    %c0_i32_17 = arith.constant 0 : i32
    %64 = arith.cmpi eq, %arg1, %c0_i32_17 : i32
    %65 = arith.extui %64 : i1 to i32
    %c0_i32_18 = arith.constant 0 : i32
    %66 = arith.cmpi ne, %65, %c0_i32_18 : i32
    scf.if %66 {
      %c0_19 = arith.constant 0 : index
      %c0_20 = arith.constant 0 : index
      %67 = vector.load %arg5[%c0_19, %c0_20] : memref<1x128xf32, #tpu.memory_space<vmem>>, vector<1x128xf32>
      %68 = vector.shape_cast %67 : vector<1x128xf32> to vector<1x1x128xf32>
      %cst_21 = arith.constant dense<0.000000e+00> : vector<1xf32>
      %69 = vector.multi_reduction <add>, %68, %cst_21 [1, 2] : vector<1x1x128xf32> to vector<1xf32>
      %70 = vector.shape_cast %69 : vector<1xf32> to vector<1x1x1xf32>
      %71 = vector.extract %70[0, 0, 0] : f32 from vector<1x1x1xf32>
      %72 = vector.broadcast %71 : f32 to vector<8x128xf32>
      %c0_22 = arith.constant 0 : index
      %c0_23 = arith.constant 0 : index
      %73 = vector.load %arg4[%c0_22, %c0_23] : memref<8x128xf32, #tpu.memory_space<vmem>>, vector<8x128xf32>
      tpu.vector_store %arg4[%c0_22, %c0_23], %72 {strides = array<i32>} : memref<8x128xf32, #tpu.memory_space<vmem>>, vector<8x128xf32>,
    } else {
    }
    return
  }
  func.func @transform_0(%arg0: i32, %arg1: i32) -> (i32, i32) {
    %c1_i32 = arith.constant 1 : i32
    %0 = arith.muli %arg0, %c1_i32 : i32
    %1 = arith.addi %0, %arg1 : i32
    %c0_i32 = arith.constant 0 : i32
    %c0_i32_0 = arith.constant 0 : i32
    return %c0_i32, %1 : i32, i32
  }
  func.func @transform_1(%arg0: i32, %arg1: i32) -> (i32, i32) {
    %c1_i32 = arith.constant 1 : i32
    %0 = arith.muli %arg0, %c1_i32 : i32
    %1 = arith.addi %0, %arg1 : i32
    %c0_i32 = arith.constant 0 : i32
    %c0_i32_0 = arith.constant 0 : i32
    return %c0_i32, %1 : i32, i32
  }
  func.func @transform_2(%arg0: i32, %arg1: i32) -> (i32, i32) {
    %c0_i32 = arith.constant 0 : i32
    %c0_i32_0 = arith.constant 0 : i32
    return %arg0, %c0_i32 : i32, i32
  }
}

</mosaic_0001>

<llo_original>
// kernel: tpu_custom_call.1
$region0: #{tpu_custom_call.1}
  #allocation0 [shape = 'u32[]', space=smem, size = 0x4, offset = 0x4, fixed_abs, tag = 'smem constant byte address 0x4 - core index']
  #allocation1 [shape = 'u32[144,128]{1,0:T(1,128)}', space=vmem, size = 0x12000, scoped, tag = 'internal scratch']
  #allocation2 [shape = 'f32[1,128]{1,0:T(1,128)}', space=vmem, size = 0x200, scoped, tag = 'scratch operand']
  %s0 = inlined_call_operand.hbm [shape: f32[25,128], index: 0, kind: input, shape index: {}]
  %s1 = inlined_call_operand.hbm [shape: f32[25,128], index: 1, kind: input, shape index: {}]
  %s2 = inlined_call_operand.hbm [shape: f32[8,128], index: 2, kind: output, shape index: {}]
  %s3 = sld [smem:[#allocation0]]
  $region42: #{tpu_custom_call.1} parent=0
    _
  %s5 = ssub.s32 1, %s3
  %s6 = scalar_select 0, %s5, %s3
  $region1: #{tpu_custom_call.1} parent=0
    #allocation3 [shape = 'u8[16384]{0}', space=vmem, size = 0x4000, scoped, tag = 'input window, operand 0, single buffered']
    #allocation4 [shape = 's32[1]{0}', space=sflag, size = 0x4, scoped, tag = 'scoped memory for tpu_custom_call.1']
    #allocation5 [shape = 's32[1]{0}', space=sflag, size = 0x4, scoped, tag = 'scoped memory for tpu_custom_call.1']
    #allocation6 [shape = 'u8[16384]{0}', space=vmem, size = 0x4000, scoped, tag = 'input window, operand 1, single buffered']
    #allocation7 [shape = 's32[1]{0}', space=sflag, size = 0x4, scoped, tag = 'scoped memory for tpu_custom_call.1']
    #allocation8 [shape = 'u8[4096]{0}', space=vmem, size = 0x1000, scoped, tag = 'output window, operand 0, single buffered']
    %7 = vsyncpa [#allocation4], 0
    %8 = vsyncpa [#allocation7], 0
    %9 = vsyncpa [#allocation5], 0
    // Predicated region
    $region2: #{tpu_custom_call.1} parent=1 // pred_check
      _
    $region3: #{tpu_custom_call.1} parent=1 // pred_check_branch
      %11 = sbr.rel (0) target = $region5
    $region4: #{tpu_custom_call.1} parent=1 // pred_region
      %s12 = sadd.s32 0, 0
      %s14 = ssub.s32 512, 512
      %15 = vsyncadd [#allocation4], %s14
      %s16 = smul.addr %s12, 128
      %s17 = scalar_lea.hbm %s0, %s16
      %s18 = sshll.u32 [#allocation3], 4
      %s19 = int_to_ptr.vmem [resolvable:$true] %s18
      %24 = dma.hbm_to_vmem [thread:$0]  %s17, 512, %s19, [#allocation4], 128, 128, 8
    $region5: #{tpu_custom_call.1} parent=1 // pred_fallthru
      _
    // Predicated region
    $region6: #{tpu_custom_call.1} parent=1 // pred_check
      _
    $region7: #{tpu_custom_call.1} parent=1 // pred_check_branch
      %26 = sbr.rel (0) target = $region9
    $region8: #{tpu_custom_call.1} parent=1 // pred_region
      %s27 = sadd.s32 0, 0
      %s29 = ssub.s32 512, 512
      %30 = vsyncadd [#allocation7], %s29
      %s31 = smul.addr %s27, 128
      %s32 = scalar_lea.hbm %s1, %s31
      %s33 = sshll.u32 [#allocation6], 4
      %s34 = int_to_ptr.vmem [resolvable:$true] %s33
      %39 = dma.hbm_to_vmem [thread:$0]  %s32, 512, %s34, [#allocation7], 128, 128, 8
    $region9: #{tpu_custom_call.1} parent=1 // pred_fallthru
      _
    // Predicated region
    $region10: #{tpu_custom_call.1} parent=1 // pred_check
      _
    $region11: #{tpu_custom_call.1} parent=1 // pred_check_branch
      %41 = sbr.rel (0) target = $region13
    $region12: #{tpu_custom_call.1} parent=1 // pred_region
      %42 = dma.done [#allocation4], 512
    $region13: #{tpu_custom_call.1} parent=1 // pred_fallthru
      _
    // Predicated region
    $region14: #{tpu_custom_call.1} parent=1 // pred_check
      _
    $region15: #{tpu_custom_call.1} parent=1 // pred_check_branch
      %44 = sbr.rel (0) target = $region17
    $region16: #{tpu_custom_call.1} parent=1 // pred_region
      %45 = dma.done [#allocation7], 512
    $region17: #{tpu_custom_call.1} parent=1 // pred_fallthru
      _
    %s46 = sadd.s32 0, 0
    %s47 = sadd.s32 0, 0
    %p48 = scmp.eq.s32.totalorder 0, 0
    // Predicated region
    $region18: #{tpu_custom_call.1} parent=1 // pred_check
      %p49 = pneg %p48
    $region19: #{tpu_custom_call.1} parent=1 // pred_check_branch
      %51 = sbr.rel (%p49) target = $region21
    $region20: #{tpu_custom_call.1} parent=1 // pred_region
      %52 = vst [vmem:[#allocation2] sm:$0x1] 0.0
    $region21: #{tpu_custom_call.1} parent=1 // pred_fallthru
      _
    %v53 = vld [vmem:[#allocation3] sm:$0xff]
    %v54 = vld [vmem:[#allocation3 + $0x8] sm:$0xff]
    %v55 = vld [vmem:[#allocation3 + $0x10] sm:$0xff]
    %v56 = vld [vmem:[#allocation3 + $0x18] sm:$0x1]
    %v57 = vld [vmem:[#allocation6] sm:$0xff]
    %v58 = vld [vmem:[#allocation6 + $0x8] sm:$0xff]
    %v59 = vld [vmem:[#allocation6 + $0x10] sm:$0xff]
    %v60 = vld [vmem:[#allocation6 + $0x18] sm:$0x1]
    %v61 = vadd.f32 %v55, 1e-09
    %v62 = vlog2.pop %v61
    %v63 = vmul.f32 %v62, 0.6931472
    %v64 = vmul.f32 %v59, %v63
    %v65 = vsub.f32 1.0, %v59
    %v66 = vadd.f32 %v65, 1e-09
    %v67 = vsub.f32 1.0, %v55
    %v68 = vadd.f32 %v67, 1e-09
    %v69 = vlog2.pop %v68
    %v70 = vmul.f32 %v69, 0.6931472
    %v71 = vmul.f32 %v66, %v70
    %v72 = vadd.f32 %v64, %v71
    %v73 = vlaneseq
    %v74 = vshrl.u32 %v73, 7
    %v75 = vsub.s32 0, %v74
    %v76 = vrot.slane %v60, %v75
    %v77 = vmul.f32 %v76, %v59
    %v78 = vsub.f32 %v53, %v57
    %v79 = vmul.f32 %v77, %v78
    %v80 = vand.u32 2147483647, %v79
    %v81 = vsub.f32 %v54, %v58
    %v82 = vmul.f32 %v77, %v81
    %v83 = vand.u32 2147483647, %v82
    %v84 = vadd.f32 %v80, %v83
    %v85 = vmul.f32 %v72, 0.125
    %v86 = vsub.f32 %v84, %v85
    %v87 = vadd.f32 %v56, 1e-09
    %v88 = vlog2.pop %v87
    %v89 = vmul.f32 %v88, 0.6931472
    %v90 = vmul.f32 %v60, %v89
    %v91 = vsub.f32 1.0, %v60
    %v92 = vsub.f32 1.0, %v56
    %v93 = vadd.f32 %v92, 1e-09
    %v94 = vlog2.pop %v93
    %v95 = vmul.f32 %v94, 0.6931472
    %v96 = vmul.f32 %v91, %v95
    %v97 = vadd.f32 %v90, %v96
    %v98 = vrot.slane %v86, 4
    %v99 = vadd.f32 %v86, %v98
    %v100 = vrot.slane %v99, 2
    %v101 = vadd.f32 %v99, %v100
    %v102 = vrot.slane %v101, 1
    %v103 = vadd.f32 %v101, %v102
    %v104 = vsub.f32 %v103, %v97
    %s105 = sadd.s32 0, 0
    %p106 = scmp.ge.s32.totalorder %s105, 0
    // Predicated region
    $region22: #{tpu_custom_call.1} parent=1 // pred_check
      %p107 = pneg %p106
    $region23: #{tpu_custom_call.1} parent=1 // pred_check_branch
      %109 = sbr.rel (%p107) target = $region25
    $region24: #{tpu_custom_call.1} parent=1 // pred_region
      %v110 = vlaneseq
      %v111 = vand.u32 %v110, 127
      %s112 = smul.u32 %s105, 128
      %v113 = vstv %s112
      %v114 = vadd.s32 %v113, %v111
      %vm115 = vcmp.lt.s32.totalorder %v114, 48
      %v116 = vsel %vm115, 1, 0
      %v117 = vcvt.s32.f32 %v116
      %v118 = vld [vmem:[#allocation2] sm:$0x1]
      %v119 = vmul.f32 %v117, %v104
      %v120 = vadd.f32 %v118, %v119
      %121 = vst [vmem:[#allocation2] sm:$0x1] %v120
    $region25: #{tpu_custom_call.1} parent=1 // pred_fallthru
      _
    %p122 = scmp.lt.s32.totalorder %s105, 0
    // Predicated region
    $region26: #{tpu_custom_call.1} parent=1 // pred_check
      %p123 = pneg %p122
    $region27: #{tpu_custom_call.1} parent=1 // pred_check_branch
      %125 = sbr.rel (%p123) target = $region29
    $region28: #{tpu_custom_call.1} parent=1 // pred_region
      %v126 = vld [vmem:[#allocation2] sm:$0x1]
      %v127 = vadd.f32 %v126, %v104
      %128 = vst [vmem:[#allocation2] sm:$0x1] %v127
    $region29: #{tpu_custom_call.1} parent=1 // pred_fallthru
      _
    // Predicated region
    $region30: #{tpu_custom_call.1} parent=1 // pred_check
      %p129 = pneg %p48
    $region31: #{tpu_custom_call.1} parent=1 // pred_check_branch
      %131 = sbr.rel (%p129) target = $region33
    $region32: #{tpu_custom_call.1} parent=1 // pred_region
      %v132 = vld [vmem:[#allocation2] sm:$0x1]
      %vm133 = vcmask 1040384
      %v134 = vsel %vm133, %v132, 0.0
      %135 = vadd.xlane.f32.xlu0 %v134
      %v136 = vpop.xlane.xlu0 %135
      %v137 = vrot.slane %v136, 4
      %v138 = vadd.f32 %v136, %v137
      %v139 = vrot.slane %v138, 2
      %v140 = vadd.f32 %v138, %v139
      %v141 = vrot.slane %v140, 1
      %v142 = vadd.f32 %v140, %v141
      %s143 = vtos %v142
      %v144 = vstv %s143
      %145 = vst [vmem:[#allocation8] sm:$0xff] %v144
    $region33: #{tpu_custom_call.1} parent=1 // pred_fallthru
      _
    // Predicated region
    $region34: #{tpu_custom_call.1} parent=1 // pred_check
      _
    $region35: #{tpu_custom_call.1} parent=1 // pred_check_branch
      %147 = sbr.rel (0) target = $region37
    $region36: #{tpu_custom_call.1} parent=1 // pred_region
      %s149 = ssub.s32 128, 128
      %150 = vsyncadd [#allocation5], %s149
      %s152 = sshll.u32 [#allocation8], 4
      %s153 = int_to_ptr.vmem [resolvable:$true] %s152
      %155 = dma.vmem_to_hbm [thread:$0]  %s153, 128, %s2, [#allocation5]
    $region37: #{tpu_custom_call.1} parent=1 // pred_fallthru
      _
    // Predicated region
    $region38: #{tpu_custom_call.1} parent=1 // pred_check
      _
    $region39: #{tpu_custom_call.1} parent=1 // pred_check_branch
      %157 = sbr.rel (0) target = $region41
    $region40: #{tpu_custom_call.1} parent=1 // pred_region
      %158 = dma.done [#allocation5], 128
    $region41: #{tpu_custom_call.1} parent=1 // pred_fallthru
      _
    %159 = vsyncpa [#allocation4], 1
    %160 = vsyncpa [#allocation7], 1
    %161 = vsyncpa [#allocation5], 1

</llo_original>
